<compile_context>
chip_gen: v6e
topology: v6e:2x2x1
jax: 0.10.0
libtpu: 0.0.40
codegen_flags: <defaults>
</compile_context>

<pallas_src>
import jax
import jax.numpy as jnp
from jax.experimental import pallas as pl
from jax.experimental.pallas import tpu as pltpu


def _linear_odef_kernel(w_ref, xT_ref, oT_ref):
    """o^T = W @ x^T computed as scalar-broadcast FMAs on the VPU.

    w_ref : SMEM (D_out, D_in)  -- torch nn.Linear weight layout (out, in)
    xT_ref: VMEM (D_in, B)      -- batch-in-lanes state
    oT_ref: VMEM (D_out, B)     -- batch-in-lanes output
    """
    d_out, d_in = w_ref.shape
    xT = xT_ref[...]                                   # (D_in, B), loaded once
    for j in range(d_out):                             # fully unrolled: 5 x 5 FMAs
        acc = w_ref[j, 0] * xT[0:1, :]                 # scalar * (1, B) broadcast
        for k in range(1, d_in):
            acc = acc + w_ref[j, k] * xT[k:k + 1, :]
        oT_ref[j:j + 1, :] = acc


def linear_odef_forward(x, t, W):
    """Pallas equivalent of LinearODEF.forward(x, t) = x @ W.T.

    x: (B, 5) float32
    t: unused (kept for signature parity with the PyTorch module)
    W: (5, 5) float32, torch nn.Linear weight layout (out, in)
    """
    del t  # forward ignores t, exactly like the PyTorch module
    B, d_in = x.shape
    d_out = W.shape[0]

    flops = 2 * B * d_in * d_out
    bytes_accessed = 4 * (B * d_in + d_out * d_in + B * d_out)

    oT = pl.pallas_call(
        _linear_odef_kernel,
        out_shape=jax.ShapeDtypeStruct((d_out, B), x.dtype),
        in_specs=[
            # W is a tiny scalar table -> SMEM (cheap scalar-indexed reads).
            pl.BlockSpec(memory_space=pltpu.MemorySpace.SMEM),
            # x^T full-array in VMEM, batch on the lane axis.
            pl.BlockSpec(memory_space=pltpu.MemorySpace.VMEM),
        ],
        out_specs=pl.BlockSpec(memory_space=pltpu.MemorySpace.VMEM),
        cost_estimate=pl.CostEstimate(
            flops=flops, transcendentals=0, bytes_accessed=bytes_accessed
        ),
    )(W, x.T)

    # Layout plumbing back to the module's (B, D_out) convention.
    return oT.T


if __name__ == "__main__":
    key = jax.random.PRNGKey(0)
    k_w, k_x, k_t = jax.random.split(key, 3)

    # Deterministic synthetic parameter: W is the (5, 5) weight of
    # nn.Linear(5, 5, bias=False).
    W = jax.random.normal(k_w, (5, 5), dtype=jnp.float32) * 0.1

    # Small example inputs consistent with the module: batch=8 states of dim 5.
    B = 8
    x = jax.random.normal(k_x, (B, 5), dtype=jnp.float32)
    t = jax.random.normal(k_t, (B, 1), dtype=jnp.float32)  # unused by forward

    out = jax.block_until_ready(linear_odef_forward(x, t, W))

    # Reference check against plain JAX (x @ W.T).
    ref = x @ W.T
    assert out.shape == (B, 5)
    assert jnp.allclose(out, ref, atol=1e-5, rtol=1e-5)

    print("KERNEL_OK")
</pallas_src>

<mosaic_0001>
module attributes {stable_mosaic.version = 11 : i64} {
  func.func @_linear_odef_kernel(%arg0: memref<5x5xf32, #tpu.memory_space<smem>>, %arg1: memref<5x8xf32, #tpu.memory_space<vmem>>, %arg2: memref<5x8xf32, #tpu.memory_space<vmem>>) attributes {dimension_semantics = [], scalar_prefetch = 0 : i64, scratch_operands = 0 : i64, tpu.core_type = #tpu.core_type<tc>} {
    %c0 = arith.constant 0 : index
    %c0_0 = arith.constant 0 : index
    %0 = vector.load %arg1[%c0, %c0_0] : memref<5x8xf32, #tpu.memory_space<vmem>>, vector<5x8xf32>
    %c0_1 = arith.constant 0 : index
    %c0_2 = arith.constant 0 : index
    %1 = memref.load %arg0[%c0_1, %c0_2] : memref<5x5xf32, #tpu.memory_space<smem>>
    %2 = vector.extract_strided_slice %0 {offsets = [0, 0], sizes = [1, 8], strides = [1, 1]} : vector<5x8xf32> to vector<1x8xf32>
    %3 = vector.broadcast %1 : f32 to vector<1x8xf32>
    %4 = arith.mulf %3, %2 : vector<1x8xf32>
    %c0_3 = arith.constant 0 : index
    %c1 = arith.constant 1 : index
    %5 = memref.load %arg0[%c0_3, %c1] : memref<5x5xf32, #tpu.memory_space<smem>>
    %6 = vector.extract_strided_slice %0 {offsets = [1, 0], sizes = [1, 8], strides = [1, 1]} : vector<5x8xf32> to vector<1x8xf32>
    %7 = vector.broadcast %5 : f32 to vector<1x8xf32>
    %8 = arith.mulf %7, %6 : vector<1x8xf32>
    %9 = arith.addf %4, %8 : vector<1x8xf32>
    %c0_4 = arith.constant 0 : index
    %c2 = arith.constant 2 : index
    %10 = memref.load %arg0[%c0_4, %c2] : memref<5x5xf32, #tpu.memory_space<smem>>
    %11 = vector.extract_strided_slice %0 {offsets = [2, 0], sizes = [1, 8], strides = [1, 1]} : vector<5x8xf32> to vector<1x8xf32>
    %12 = vector.broadcast %10 : f32 to vector<1x8xf32>
    %13 = arith.mulf %12, %11 : vector<1x8xf32>
    %14 = arith.addf %9, %13 : vector<1x8xf32>
    %c0_5 = arith.constant 0 : index
    %c3 = arith.constant 3 : index
    %15 = memref.load %arg0[%c0_5, %c3] : memref<5x5xf32, #tpu.memory_space<smem>>
    %16 = vector.extract_strided_slice %0 {offsets = [3, 0], sizes = [1, 8], strides = [1, 1]} : vector<5x8xf32> to vector<1x8xf32>
    %17 = vector.broadcast %15 : f32 to vector<1x8xf32>
    %18 = arith.mulf %17, %16 : vector<1x8xf32>
    %19 = arith.addf %14, %18 : vector<1x8xf32>
    %c0_6 = arith.constant 0 : index
    %c4 = arith.constant 4 : index
    %20 = memref.load %arg0[%c0_6, %c4] : memref<5x5xf32, #tpu.memory_space<smem>>
    %21 = vector.extract_strided_slice %0 {offsets = [4, 0], sizes = [1, 8], strides = [1, 1]} : vector<5x8xf32> to vector<1x8xf32>
    %22 = vector.broadcast %20 : f32 to vector<1x8xf32>
    %23 = arith.mulf %22, %21 : vector<1x8xf32>
    %24 = arith.addf %19, %23 : vector<1x8xf32>
    %c0_7 = arith.constant 0 : index
    %c0_8 = arith.constant 0 : index
    %25 = vector.load %arg2[%c0_7, %c0_8] : memref<5x8xf32, #tpu.memory_space<vmem>>, vector<1x8xf32>
    tpu.vector_store %arg2[%c0_7, %c0_8], %24 {strides = array<i32>} : memref<5x8xf32, #tpu.memory_space<vmem>>, vector<1x8xf32>,
    %c1_9 = arith.constant 1 : index
    %c0_10 = arith.constant 0 : index
    %26 = memref.load %arg0[%c1_9, %c0_10] : memref<5x5xf32, #tpu.memory_space<smem>>
    %27 = vector.extract_strided_slice %0 {offsets = [0, 0], sizes = [1, 8], strides = [1, 1]} : vector<5x8xf32> to vector<1x8xf32>
    %28 = vector.broadcast %26 : f32 to vector<1x8xf32>
    %29 = arith.mulf %28, %27 : vector<1x8xf32>
    %c1_11 = arith.constant 1 : index
    %c1_12 = arith.constant 1 : index
    %30 = memref.load %arg0[%c1_11, %c1_12] : memref<5x5xf32, #tpu.memory_space<smem>>
    %31 = vector.extract_strided_slice %0 {offsets = [1, 0], sizes = [1, 8], strides = [1, 1]} : vector<5x8xf32> to vector<1x8xf32>
    %32 = vector.broadcast %30 : f32 to vector<1x8xf32>
    %33 = arith.mulf %32, %31 : vector<1x8xf32>
    %34 = arith.addf %29, %33 : vector<1x8xf32>
    %c1_13 = arith.constant 1 : index
    %c2_14 = arith.constant 2 : index
    %35 = memref.load %arg0[%c1_13, %c2_14] : memref<5x5xf32, #tpu.memory_space<smem>>
    %36 = vector.extract_strided_slice %0 {offsets = [2, 0], sizes = [1, 8], strides = [1, 1]} : vector<5x8xf32> to vector<1x8xf32>
    %37 = vector.broadcast %35 : f32 to vector<1x8xf32>
    %38 = arith.mulf %37, %36 : vector<1x8xf32>
    %39 = arith.addf %34, %38 : vector<1x8xf32>
    %c1_15 = arith.constant 1 : index
    %c3_16 = arith.constant 3 : index
    %40 = memref.load %arg0[%c1_15, %c3_16] : memref<5x5xf32, #tpu.memory_space<smem>>
    %41 = vector.extract_strided_slice %0 {offsets = [3, 0], sizes = [1, 8], strides = [1, 1]} : vector<5x8xf32> to vector<1x8xf32>
    %42 = vector.broadcast %40 : f32 to vector<1x8xf32>
    %43 = arith.mulf %42, %41 : vector<1x8xf32>
    %44 = arith.addf %39, %43 : vector<1x8xf32>
    %c1_17 = arith.constant 1 : index
    %c4_18 = arith.constant 4 : index
    %45 = memref.load %arg0[%c1_17, %c4_18] : memref<5x5xf32, #tpu.memory_space<smem>>
    %46 = vector.extract_strided_slice %0 {offsets = [4, 0], sizes = [1, 8], strides = [1, 1]} : vector<5x8xf32> to vector<1x8xf32>
    %47 = vector.broadcast %45 : f32 to vector<1x8xf32>
    %48 = arith.mulf %47, %46 : vector<1x8xf32>
    %49 = arith.addf %44, %48 : vector<1x8xf32>
    %c1_19 = arith.constant 1 : index
    %c0_20 = arith.constant 0 : index
    %50 = vector.load %arg2[%c1_19, %c0_20] : memref<5x8xf32, #tpu.memory_space<vmem>>, vector<1x8xf32>
    tpu.vector_store %arg2[%c1_19, %c0_20], %49 {strides = array<i32>} : memref<5x8xf32, #tpu.memory_space<vmem>>, vector<1x8xf32>,
    %c2_21 = arith.constant 2 : index
    %c0_22 = arith.constant 0 : index
    %51 = memref.load %arg0[%c2_21, %c0_22] : memref<5x5xf32, #tpu.memory_space<smem>>
    %52 = vector.extract_strided_slice %0 {offsets = [0, 0], sizes = [1, 8], strides = [1, 1]} : vector<5x8xf32> to vector<1x8xf32>
    %53 = vector.broadcast %51 : f32 to vector<1x8xf32>
    %54 = arith.mulf %53, %52 : vector<1x8xf32>
    %c2_23 = arith.constant 2 : index
    %c1_24 = arith.constant 1 : index
    %55 = memref.load %arg0[%c2_23, %c1_24] : memref<5x5xf32, #tpu.memory_space<smem>>
    %56 = vector.extract_strided_slice %0 {offsets = [1, 0], sizes = [1, 8], strides = [1, 1]} : vector<5x8xf32> to vector<1x8xf32>
    %57 = vector.broadcast %55 : f32 to vector<1x8xf32>
    %58 = arith.mulf %57, %56 : vector<1x8xf32>
    %59 = arith.addf %54, %58 : vector<1x8xf32>
    %c2_25 = arith.constant 2 : index
    %c2_26 = arith.constant 2 : index
    %60 = memref.load %arg0[%c2_25, %c2_26] : memref<5x5xf32, #tpu.memory_space<smem>>
    %61 = vector.extract_strided_slice %0 {offsets = [2, 0], sizes = [1, 8], strides = [1, 1]} : vector<5x8xf32> to vector<1x8xf32>
    %62 = vector.broadcast %60 : f32 to vector<1x8xf32>
    %63 = arith.mulf %62, %61 : vector<1x8xf32>
    %64 = arith.addf %59, %63 : vector<1x8xf32>
    %c2_27 = arith.constant 2 : index
    %c3_28 = arith.constant 3 : index
    %65 = memref.load %arg0[%c2_27, %c3_28] : memref<5x5xf32, #tpu.memory_space<smem>>
    %66 = vector.extract_strided_slice %0 {offsets = [3, 0], sizes = [1, 8], strides = [1, 1]} : vector<5x8xf32> to vector<1x8xf32>
    %67 = vector.broadcast %65 : f32 to vector<1x8xf32>
    %68 = arith.mulf %67, %66 : vector<1x8xf32>
    %69 = arith.addf %64, %68 : vector<1x8xf32>
    %c2_29 = arith.constant 2 : index
    %c4_30 = arith.constant 4 : index
    %70 = memref.load %arg0[%c2_29, %c4_30] : memref<5x5xf32, #tpu.memory_space<smem>>
    %71 = vector.extract_strided_slice %0 {offsets = [4, 0], sizes = [1, 8], strides = [1, 1]} : vector<5x8xf32> to vector<1x8xf32>
    %72 = vector.broadcast %70 : f32 to vector<1x8xf32>
    %73 = arith.mulf %72, %71 : vector<1x8xf32>
    %74 = arith.addf %69, %73 : vector<1x8xf32>
    %c2_31 = arith.constant 2 : index
    %c0_32 = arith.constant 0 : index
    %75 = vector.load %arg2[%c2_31, %c0_32] : memref<5x8xf32, #tpu.memory_space<vmem>>, vector<1x8xf32>
    tpu.vector_store %arg2[%c2_31, %c0_32], %74 {strides = array<i32>} : memref<5x8xf32, #tpu.memory_space<vmem>>, vector<1x8xf32>,
    %c3_33 = arith.constant 3 : index
    %c0_34 = arith.constant 0 : index
    %76 = memref.load %arg0[%c3_33, %c0_34] : memref<5x5xf32, #tpu.memory_space<smem>>
    %77 = vector.extract_strided_slice %0 {offsets = [0, 0], sizes = [1, 8], strides = [1, 1]} : vector<5x8xf32> to vector<1x8xf32>
    %78 = vector.broadcast %76 : f32 to vector<1x8xf32>
    %79 = arith.mulf %78, %77 : vector<1x8xf32>
    %c3_35 = arith.constant 3 : index
    %c1_36 = arith.constant 1 : index
    %80 = memref.load %arg0[%c3_35, %c1_36] : memref<5x5xf32, #tpu.memory_space<smem>>
    %81 = vector.extract_strided_slice %0 {offsets = [1, 0], sizes = [1, 8], strides = [1, 1]} : vector<5x8xf32> to vector<1x8xf32>
    %82 = vector.broadcast %80 : f32 to vector<1x8xf32>
    %83 = arith.mulf %82, %81 : vector<1x8xf32>
    %84 = arith.addf %79, %83 : vector<1x8xf32>
    %c3_37 = arith.constant 3 : index
    %c2_38 = arith.constant 2 : index
    %85 = memref.load %arg0[%c3_37, %c2_38] : memref<5x5xf32, #tpu.memory_space<smem>>
    %86 = vector.extract_strided_slice %0 {offsets = [2, 0], sizes = [1, 8], strides = [1, 1]} : vector<5x8xf32> to vector<1x8xf32>
    %87 = vector.broadcast %85 : f32 to vector<1x8xf32>
    %88 = arith.mulf %87, %86 : vector<1x8xf32>
    %89 = arith.addf %84, %88 : vector<1x8xf32>
    %c3_39 = arith.constant 3 : index
    %c3_40 = arith.constant 3 : index
    %90 = memref.load %arg0[%c3_39, %c3_40] : memref<5x5xf32, #tpu.memory_space<smem>>
    %91 = vector.extract_strided_slice %0 {offsets = [3, 0], sizes = [1, 8], strides = [1, 1]} : vector<5x8xf32> to vector<1x8xf32>
    %92 = vector.broadcast %90 : f32 to vector<1x8xf32>
    %93 = arith.mulf %92, %91 : vector<1x8xf32>
    %94 = arith.addf %89, %93 : vector<1x8xf32>
    %c3_41 = arith.constant 3 : index
    %c4_42 = arith.constant 4 : index
    %95 = memref.load %arg0[%c3_41, %c4_42] : memref<5x5xf32, #tpu.memory_space<smem>>
    %96 = vector.extract_strided_slice %0 {offsets = [4, 0], sizes = [1, 8], strides = [1, 1]} : vector<5x8xf32> to vector<1x8xf32>
    %97 = vector.broadcast %95 : f32 to vector<1x8xf32>
    %98 = arith.mulf %97, %96 : vector<1x8xf32>
    %99 = arith.addf %94, %98 : vector<1x8xf32>
    %c3_43 = arith.constant 3 : index
    %c0_44 = arith.constant 0 : index
    %100 = vector.load %arg2[%c3_43, %c0_44] : memref<5x8xf32, #tpu.memory_space<vmem>>, vector<1x8xf32>
    tpu.vector_store %arg2[%c3_43, %c0_44], %99 {strides = array<i32>} : memref<5x8xf32, #tpu.memory_space<vmem>>, vector<1x8xf32>,
    %c4_45 = arith.constant 4 : index
    %c0_46 = arith.constant 0 : index
    %101 = memref.load %arg0[%c4_45, %c0_46] : memref<5x5xf32, #tpu.memory_space<smem>>
    %102 = vector.extract_strided_slice %0 {offsets = [0, 0], sizes = [1, 8], strides = [1, 1]} : vector<5x8xf32> to vector<1x8xf32>
    %103 = vector.broadcast %101 : f32 to vector<1x8xf32>
    %104 = arith.mulf %103, %102 : vector<1x8xf32>
    %c4_47 = arith.constant 4 : index
    %c1_48 = arith.constant 1 : index
    %105 = memref.load %arg0[%c4_47, %c1_48] : memref<5x5xf32, #tpu.memory_space<smem>>
    %106 = vector.extract_strided_slice %0 {offsets = [1, 0], sizes = [1, 8], strides = [1, 1]} : vector<5x8xf32> to vector<1x8xf32>
    %107 = vector.broadcast %105 : f32 to vector<1x8xf32>
    %108 = arith.mulf %107, %106 : vector<1x8xf32>
    %109 = arith.addf %104, %108 : vector<1x8xf32>
    %c4_49 = arith.constant 4 : index
    %c2_50 = arith.constant 2 : index
    %110 = memref.load %arg0[%c4_49, %c2_50] : memref<5x5xf32, #tpu.memory_space<smem>>
    %111 = vector.extract_strided_slice %0 {offsets = [2, 0], sizes = [1, 8], strides = [1, 1]} : vector<5x8xf32> to vector<1x8xf32>
    %112 = vector.broadcast %110 : f32 to vector<1x8xf32>
    %113 = arith.mulf %112, %111 : vector<1x8xf32>
    %114 = arith.addf %109, %113 : vector<1x8xf32>
    %c4_51 = arith.constant 4 : index
    %c3_52 = arith.constant 3 : index
    %115 = memref.load %arg0[%c4_51, %c3_52] : memref<5x5xf32, #tpu.memory_space<smem>>
    %116 = vector.extract_strided_slice %0 {offsets = [3, 0], sizes = [1, 8], strides = [1, 1]} : vector<5x8xf32> to vector<1x8xf32>
    %117 = vector.broadcast %115 : f32 to vector<1x8xf32>
    %118 = arith.mulf %117, %116 : vector<1x8xf32>
    %119 = arith.addf %114, %118 : vector<1x8xf32>
    %c4_53 = arith.constant 4 : index
    %c4_54 = arith.constant 4 : index
    %120 = memref.load %arg0[%c4_53, %c4_54] : memref<5x5xf32, #tpu.memory_space<smem>>
    %121 = vector.extract_strided_slice %0 {offsets = [4, 0], sizes = [1, 8], strides = [1, 1]} : vector<5x8xf32> to vector<1x8xf32>
    %122 = vector.broadcast %120 : f32 to vector<1x8xf32>
    %123 = arith.mulf %122, %121 : vector<1x8xf32>
    %124 = arith.addf %119, %123 : vector<1x8xf32>
    %c4_55 = arith.constant 4 : index
    %c0_56 = arith.constant 0 : index
    %125 = vector.load %arg2[%c4_55, %c0_56] : memref<5x8xf32, #tpu.memory_space<vmem>>, vector<1x8xf32>
    tpu.vector_store %arg2[%c4_55, %c0_56], %124 {strides = array<i32>} : memref<5x8xf32, #tpu.memory_space<vmem>>, vector<1x8xf32>,
    return
  }
}

</mosaic_0001>

<llo_original>
// kernel: tpu_custom_call.1
$region0: #{tpu_custom_call.1}
  #allocation0 [shape = 'u32[]', space=smem, size = 0x4, offset = 0x4, fixed_abs, tag = 'smem constant byte address 0x4 - core index']
  #allocation1 [shape = 'u32[144,128]{1,0:T(1,128)}', space=vmem, size = 0x12000, scoped, tag = 'internal scratch']
  %s0 = inlined_call_operand.hbm [shape: f32[5,5], index: 0, kind: input, shape index: {}]
  %s1 = inlined_call_operand.hbm [shape: f32[5,8], index: 1, kind: input, shape index: {}]
  %s2 = inlined_call_operand.hbm [shape: f32[5,8], index: 2, kind: output, shape index: {}]
  %s3 = sld [smem:[#allocation0]]
  $region26: #{tpu_custom_call.1} parent=0
    _
  %s5 = ssub.s32 1, %s3
  %s6 = scalar_select 0, %s5, %s3
  $region1: #{tpu_custom_call.1} parent=0
    #allocation2 [shape = 'u8[4096]{0}', space=smem, size = 0x1000, scoped, tag = 'input window, operand 0, single buffered']
    #allocation3 [shape = 's32[1]{0}', space=sflag, size = 0x4, scoped, tag = 'scoped memory for tpu_custom_call.1']
    #allocation4 [shape = 's32[1]{0}', space=sflag, size = 0x4, scoped, tag = 'scoped memory for tpu_custom_call.1']
    #allocation5 [shape = 's32[1]{0}', space=sflag, size = 0x4, scoped, tag = 'scoped memory for tpu_custom_call.1']
    #allocation6 [shape = 'u8[4096]{0}', space=vmem, size = 0x1000, scoped, tag = 'input window, operand 1, single buffered']
    #allocation7 [shape = 'u8[4096]{0}', space=vmem, size = 0x1000, scoped, tag = 'output window, operand 0, single buffered']
    %7 = vsyncpa [#allocation5], 0
    %8 = vsyncpa [#allocation3], 0
    %9 = vsyncpa [#allocation4], 0
    // Predicated region
    $region2: #{tpu_custom_call.1} parent=1 // pred_check
      _
    $region3: #{tpu_custom_call.1} parent=1 // pred_check_branch
      %11 = sbr.rel (0) target = $region5
    $region4: #{tpu_custom_call.1} parent=1 // pred_region
      %s13 = ssub.s32 128, 128
      %14 = vsyncadd [#allocation5], %s13
      %17 = dma.hbm_to_smem %s0, 128, [#allocation2], [#allocation5]
    $region5: #{tpu_custom_call.1} parent=1 // pred_fallthru
      _
    // Predicated region
    $region6: #{tpu_custom_call.1} parent=1 // pred_check
      _
    $region7: #{tpu_custom_call.1} parent=1 // pred_check_branch
      %19 = sbr.rel (0) target = $region9
    $region8: #{tpu_custom_call.1} parent=1 // pred_region
      %s21 = ssub.s32 128, 128
      %22 = vsyncadd [#allocation3], %s21
      %s24 = sshll.u32 [#allocation6], 4
      %s25 = int_to_ptr.vmem [resolvable:$true] %s24
      %27 = dma.hbm_to_vmem [thread:$0]  %s1, 128, %s25, [#allocation3]
    $region9: #{tpu_custom_call.1} parent=1 // pred_fallthru
      _
    // Predicated region
    $region10: #{tpu_custom_call.1} parent=1 // pred_check
      _
    $region11: #{tpu_custom_call.1} parent=1 // pred_check_branch
      %29 = sbr.rel (0) target = $region13
    $region12: #{tpu_custom_call.1} parent=1 // pred_region
      %30 = dma.done [#allocation5], 128
    $region13: #{tpu_custom_call.1} parent=1 // pred_fallthru
      _
    // Predicated region
    $region14: #{tpu_custom_call.1} parent=1 // pred_check
      _
    $region15: #{tpu_custom_call.1} parent=1 // pred_check_branch
      %32 = sbr.rel (0) target = $region17
    $region16: #{tpu_custom_call.1} parent=1 // pred_region
      %33 = dma.done [#allocation3], 128
    $region17: #{tpu_custom_call.1} parent=1 // pred_fallthru
      _
    %34 = sfence
    %v35 = vld [vmem:[#allocation6] sm:$0x1f]
    %s36 = sld [smem:[#allocation2]]
    %v37 = vstv %s36
    %v38 = vmul.f32 %v37, %v35
    %s39 = sld [smem:[#allocation2 + $0x1]]
    %v40 = vstv %s39
    %v41 = vmul.f32 %v40, %v35
    %v43 = vrot.slane %v41, 1
    %v45 = vadd.f32 %v38, %v43
    %s46 = sld [smem:[#allocation2 + $0x2]]
    %v47 = vstv %s46
    %v48 = vmul.f32 %v47, %v35
    %v50 = vrot.slane %v48, 2
    %v52 = vadd.f32 %v45, %v50
    %s53 = sld [smem:[#allocation2 + $0x3]]
    %v54 = vstv %s53
    %v55 = vmul.f32 %v54, %v35
    %v57 = vrot.slane %v55, 3
    %v59 = vadd.f32 %v52, %v57
    %s60 = sld [smem:[#allocation2 + $0x4]]
    %v61 = vstv %s60
    %v62 = vmul.f32 %v61, %v35
    %v64 = vrot.slane %v62, 4
    %v66 = vadd.f32 %v59, %v64
    %vm67 = vcmask 57344
    %68 = vst.msk [vmem:[#allocation7] sm:$0x1] %vm67, %v66
    %s69 = sld [smem:[#allocation2 + $0x80]]
    %v70 = vstv %s69
    %v71 = vmul.f32 %v70, %v35
    %s72 = sld [smem:[#allocation2 + $0x81]]
    %v73 = vstv %s72
    %v74 = vmul.f32 %v73, %v35
    %v76 = vrot.slane %v74, 1
    %v78 = vadd.f32 %v71, %v76
    %s79 = sld [smem:[#allocation2 + $0x82]]
    %v80 = vstv %s79
    %v81 = vmul.f32 %v80, %v35
    %v83 = vrot.slane %v81, 2
    %v85 = vadd.f32 %v78, %v83
    %s86 = sld [smem:[#allocation2 + $0x83]]
    %v87 = vstv %s86
    %v88 = vmul.f32 %v87, %v35
    %v90 = vrot.slane %v88, 3
    %v92 = vadd.f32 %v85, %v90
    %s93 = sld [smem:[#allocation2 + $0x84]]
    %v94 = vstv %s93
    %v95 = vmul.f32 %v94, %v35
    %v97 = vrot.slane %v95, 4
    %v99 = vadd.f32 %v92, %v97
    %100 = vst.msk [vmem:[#allocation7 + $0x1] sm:$0x1] %vm67, %v99
    %s101 = sld [smem:[#allocation2 + $0x100]]
    %v102 = vstv %s101
    %v103 = vmul.f32 %v102, %v35
    %s104 = sld [smem:[#allocation2 + $0x101]]
    %v105 = vstv %s104
    %v106 = vmul.f32 %v105, %v35
    %v108 = vrot.slane %v106, 1
    %v110 = vadd.f32 %v103, %v108
    %s111 = sld [smem:[#allocation2 + $0x102]]
    %v112 = vstv %s111
    %v113 = vmul.f32 %v112, %v35
    %v115 = vrot.slane %v113, 2
    %v117 = vadd.f32 %v110, %v115
    %s118 = sld [smem:[#allocation2 + $0x103]]
    %v119 = vstv %s118
    %v120 = vmul.f32 %v119, %v35
    %v122 = vrot.slane %v120, 3
    %v124 = vadd.f32 %v117, %v122
    %s125 = sld [smem:[#allocation2 + $0x104]]
    %v126 = vstv %s125
    %v127 = vmul.f32 %v126, %v35
    %v129 = vrot.slane %v127, 4
    %v131 = vadd.f32 %v124, %v129
    %132 = vst.msk [vmem:[#allocation7 + $0x2] sm:$0x1] %vm67, %v131
    %s133 = sld [smem:[#allocation2 + $0x180]]
    %v134 = vstv %s133
    %v135 = vmul.f32 %v134, %v35
    %s136 = sld [smem:[#allocation2 + $0x181]]
    %v137 = vstv %s136
    %v138 = vmul.f32 %v137, %v35
    %v140 = vrot.slane %v138, 1
    %v142 = vadd.f32 %v135, %v140
    %s143 = sld [smem:[#allocation2 + $0x182]]
    %v144 = vstv %s143
    %v145 = vmul.f32 %v144, %v35
    %v147 = vrot.slane %v145, 2
    %v149 = vadd.f32 %v142, %v147
    %s150 = sld [smem:[#allocation2 + $0x183]]
    %v151 = vstv %s150
    %v152 = vmul.f32 %v151, %v35
    %v154 = vrot.slane %v152, 3
    %v156 = vadd.f32 %v149, %v154
    %s157 = sld [smem:[#allocation2 + $0x184]]
    %v158 = vstv %s157
    %v159 = vmul.f32 %v158, %v35
    %v161 = vrot.slane %v159, 4
    %v163 = vadd.f32 %v156, %v161
    %164 = vst.msk [vmem:[#allocation7 + $0x3] sm:$0x1] %vm67, %v163
    %s165 = sld [smem:[#allocation2 + $0x200]]
    %v166 = vstv %s165
    %v167 = vmul.f32 %v166, %v35
    %s168 = sld [smem:[#allocation2 + $0x201]]
    %v169 = vstv %s168
    %v170 = vmul.f32 %v169, %v35
    %v172 = vrot.slane %v170, 1
    %v174 = vadd.f32 %v167, %v172
    %s175 = sld [smem:[#allocation2 + $0x202]]
    %v176 = vstv %s175
    %v177 = vmul.f32 %v176, %v35
    %v179 = vrot.slane %v177, 2
    %v181 = vadd.f32 %v174, %v179
    %s182 = sld [smem:[#allocation2 + $0x203]]
    %v183 = vstv %s182
    %v184 = vmul.f32 %v183, %v35
    %v186 = vrot.slane %v184, 3
    %v188 = vadd.f32 %v181, %v186
    %s189 = sld [smem:[#allocation2 + $0x204]]
    %v190 = vstv %s189
    %v191 = vmul.f32 %v190, %v35
    %v193 = vrot.slane %v191, 4
    %v195 = vadd.f32 %v188, %v193
    %196 = vst.msk [vmem:[#allocation7 + $0x4] sm:$0x1] %vm67, %v195
    // Predicated region
    $region18: #{tpu_custom_call.1} parent=1 // pred_check
      _
    $region19: #{tpu_custom_call.1} parent=1 // pred_check_branch
      %198 = sbr.rel (0) target = $region21
    $region20: #{tpu_custom_call.1} parent=1 // pred_region
      %s200 = ssub.s32 128, 128
      %201 = vsyncadd [#allocation4], %s200
      %s203 = sshll.u32 [#allocation7], 4
      %s204 = int_to_ptr.vmem [resolvable:$true] %s203
      %206 = dma.vmem_to_hbm [thread:$0]  %s204, 128, %s2, [#allocation4]
    $region21: #{tpu_custom_call.1} parent=1 // pred_fallthru
      _
    // Predicated region
    $region22: #{tpu_custom_call.1} parent=1 // pred_check
      _
    $region23: #{tpu_custom_call.1} parent=1 // pred_check_branch
      %208 = sbr.rel (0) target = $region25
    $region24: #{tpu_custom_call.1} parent=1 // pred_region
      %209 = dma.done [#allocation4], 128
    $region25: #{tpu_custom_call.1} parent=1 // pred_fallthru
      _
    %210 = vsyncpa [#allocation3], 1
    %211 = vsyncpa [#allocation4], 1
    %212 = vsyncpa [#allocation5], 1

</llo_original>
